<compile_context>
chip_gen: v5e
topology: v5e:2x2
jax: 0.10.0
libtpu: 0.0.40
codegen_flags: <defaults>
</compile_context>

<pallas_src>
import jax
import jax.numpy as jnp
from jax import lax
from jax.experimental import pallas as pl
from jax.experimental.pallas import tpu as pltpu


def _cdiv(a, b):
    return -(-a // b)


def _round_up(x, m):
    return _cdiv(x, m) * m


def _device_kind():
    try:
        return jax.devices()[0].device_kind.lower()
    except Exception:
        return ""


def _chip_config():
    """Chip-aware (block_bytes, megacore splits, scoped-VMEM override)."""
    kind = _device_kind()
    if "v7" in kind or "tpu7" in kind:
        # v7x: 2 TensorCores, 64 MiB VMEM/TC, ~3.2 TB/s HBM per TC.
        # 4 MiB f32 blocks (2 inputs x 2 buffers = 16 MiB) + elementwise
        # temps fit a 48 MiB scoped limit with headroom; 2-way split uses
        # both TensorCores.
        return (4 << 20), 2, (48 << 20)
    if "v6" in kind:
        # v6e: single TC, 128 MiB physical VMEM -> 4 MiB blocks, raised limit.
        return (4 << 20), 1, (64 << 20)
    if "v5e" in kind or "v5 lite" in kind or "v5litepod" in kind:
        # v5e: single TC, 16 MiB scoped default -> 2 MiB blocks, modest raise.
        return (2 << 20), 1, (32 << 20)
    # Unknown chip: conservative blocks, leave the scoped default alone.
    return (2 << 20), 1, None


def _pick_width(n):
    """Largest lane width w (multiple of 128) giving a copy-free (n//w, w) view.

    Prefers widths for which rows = n // w is also a multiple of 8 so the
    in-kernel sublane fold applies even to single-block inputs.
    """
    for w in (1024, 512, 256, 128):
        if n % (8 * w) == 0:
            return w, False
    for w in (1024, 512, 256, 128):
        if n % w == 0:
            return w, False
    return 128, True  # ragged n (n % 128 != 0): needs a tiny element pad


def _make_partial_kernel(tile, w, rows, steps, needs_mask, fold):
    """Kernel accumulating per-split (8, w) partials of sum(d^2) and sum(y^2)."""

    def kernel(yhat_ref, y_ref, num_ref, den_ref):
        i = pl.program_id(1)

        @pl.when(i == 0)
        def _():
            num_ref[...] = jnp.zeros_like(num_ref)
            den_ref[...] = jnp.zeros_like(den_ref)

        yhat = yhat_ref[...].astype(jnp.float32)
        y = y_ref[...].astype(jnp.float32)

        if needs_mask:
            # Zero out rows past the true row count: the tail of the last
            # block plus the at-most-one fully out-of-range block created by
            # the megacore split.  A few VPU selects, hidden under the DMA.
            g = pl.program_id(0) * steps + i          # unclamped block index
            row_start = g * tile
            rid = row_start + lax.broadcasted_iota(jnp.int32, (tile, 1), 0)
            valid = rid < rows
            yhat = jnp.where(valid, yhat, 0.0)
            y = jnp.where(valid, y, 0.0)

        d = yhat - y
        dd = d * d
        yy = y * y

        if fold:
            # Sublane-aligned fold (tile, w) -> (8, w): pure VPU vreg adds,
            # accumulated into the VMEM-resident lane-dense output block.
            num_ref[...] += jnp.sum(dd.reshape(tile // 8, 8, w), axis=0)[None]
            den_ref[...] += jnp.sum(yy.reshape(tile // 8, 8, w), axis=0)[None]
        else:
            # Tiny single-block path (rows < 8 or not a multiple of 8):
            # one cross-sublane reduce, written into sublane row 0.
            num_ref[0:1, 0:1, :] += jnp.sum(dd, axis=0, keepdims=True)[None]
            den_ref[0:1, 0:1, :] += jnp.sum(yy, axis=0, keepdims=True)[None]

    return kernel


def rrmse_loss(yhat, y, *, block_bytes=None, splits=None, vmem_limit_bytes=None):
    """Pallas implementation of rRMSELoss.forward(yhat, y).

    loss = sqrt(mean((yhat - y)**2)) / sqrt(mean(y**2))

    NOTE: an all-zero `y` yields NaN/Inf, matching the PyTorch reference.
    Keyword overrides exist for testing / tuning; defaults are chip-aware.
    """
    assert yhat.shape == y.shape, "yhat and y must have the same shape"
    n = int(yhat.size)
    if n == 0:
        return jnp.array(jnp.nan, dtype=jnp.float32)

    cfg_bytes, cfg_splits, cfg_vmem = _chip_config()
    block_bytes = cfg_bytes if block_bytes is None else block_bytes
    splits = cfg_splits if splits is None else splits
    vmem_limit_bytes = cfg_vmem if vmem_limit_bytes is None else vmem_limit_bytes

    # Copy-free lane-dense 2-D view of the flattened inputs (kept in their
    # HBM dtype; f32 upcast happens per-block inside the kernel).
    w, needs_elem_pad = _pick_width(n)
    yhat_flat = yhat.reshape(-1)
    y_flat = y.reshape(-1)
    if needs_elem_pad:
        # Rare ragged case (n % 128 != 0): pad by < 128 elements.  Padding
        # zeros add 0 to both sums.  (This is the only path that copies.)
        padded_n = _round_up(n, w)
        yhat_flat = jnp.pad(yhat_flat, (0, padded_n - n))
        y_flat = jnp.pad(y_flat, (0, padded_n - n))
    rows = yhat_flat.size // w
    yhat2d = yhat_flat.reshape(rows, w)
    y2d = y_flat.reshape(rows, w)

    # Block rows: as large as the (f32-equivalent) block-byte budget allows.
    cap_rows = max((block_bytes // (w * 4)) // 8 * 8, 8)
    if rows <= cap_rows:
        tile = rows            # single full-array block (full-dim exception)
        splits = 1
    else:
        tile = cap_rows        # multiple of 8 by construction

    total_blocks = _cdiv(rows, tile)
    splits = max(1, min(splits, total_blocks))
    steps = _cdiv(total_blocks, splits)
    extra_blocks = splits * steps - total_blocks       # 0 or 1
    needs_mask = (total_blocks * tile != rows) or (extra_blocks != 0)
    fold = (tile % 8 == 0)

    if extra_blocks:
        def in_map(c, i):
            # Clamp the (at most one) extra block to a valid index; the kernel
            # zeroes its contribution via the *unclamped* row range.
            return (jnp.minimum(c * steps + i, total_blocks - 1), 0)
    else:
        def in_map(c, i):
            return (c * steps + i, 0)

    def out_map(c, i):
        return (c, 0, 0)

    kernel = _make_partial_kernel(tile, w, rows, steps, needs_mask, fold)

    num_p, den_p = pl.pallas_call(
        kernel,
        out_shape=(
            jax.ShapeDtypeStruct((splits, 8, w), jnp.float32),
            jax.ShapeDtypeStruct((splits, 8, w), jnp.float32),
        ),
        grid_spec=pltpu.PrefetchScalarGridSpec(
            num_scalar_prefetch=0,
            grid=(splits, steps),
            in_specs=[
                pl.BlockSpec((tile, w), in_map),
                pl.BlockSpec((tile, w), in_map),
            ],
            out_specs=(
                pl.BlockSpec((1, 8, w), out_map),
                pl.BlockSpec((1, 8, w), out_map),
            ),
        ),
        compiler_params=pltpu.CompilerParams(
            dimension_semantics=("parallel", "arbitrary"),
            vmem_limit_bytes=vmem_limit_bytes,
        ),
    )(yhat2d, y2d)

    num = jnp.sum(num_p)
    den = jnp.sum(den_p)
    # sqrt(mean d^2) / sqrt(mean y^2) using the true element count n
    # (masked / padded rows contribute exactly zero to both sums).
    return jnp.sqrt(num / n) / jnp.sqrt(den / n)


def _reference(yhat, y):
    return jnp.sqrt(jnp.mean((yhat - y) ** 2)) / jnp.sqrt(jnp.mean(y ** 2))


if __name__ == "__main__":
    key = jax.random.PRNGKey(0)
    k1, k2, k3, k4 = jax.random.split(key, 4)

    # Small CNN-style output/target pair (NCHW): single-block fast path.
    yhat = jax.random.normal(k1, (2, 4, 16, 16), dtype=jnp.float32)
    y = jax.random.normal(k2, (2, 4, 16, 16), dtype=jnp.float32)
    loss = rrmse_loss(yhat, y)
    jax.block_until_ready(loss)
    ref = _reference(yhat, y)
    assert jnp.allclose(loss, ref, rtol=1e-5, atol=1e-6), (loss, ref)

    # Small multi-block check exercising the pipelined grid, the 2-way split
    # sharding of the step range, and the in-kernel row-tail masking
    # (tiny blocks forced via the tuning overrides).
    yhat2 = jax.random.normal(k3, (7, 4, 32, 64), dtype=jnp.float32)
    y2 = jax.random.normal(k4, (7, 4, 32, 64), dtype=jnp.float32)
    loss2 = rrmse_loss(yhat2, y2, block_bytes=64 * 1024, splits=2)
    jax.block_until_ready(loss2)
    ref2 = _reference(yhat2, y2)
    assert jnp.allclose(loss2, ref2, rtol=1e-5, atol=1e-6), (loss2, ref2)

    print("KERNEL_OK")
</pallas_src>

<mosaic_0001>
module attributes {stable_mosaic.version = 11 : i64} {
  func.func @kernel(%arg0: i32, %arg1: i32, %arg2: memref<8x256xf32, #tpu.memory_space<vmem>>, %arg3: memref<8x256xf32, #tpu.memory_space<vmem>>, %arg4: memref<1x8x256xf32, #tpu.memory_space<vmem>>, %arg5: memref<1x8x256xf32, #tpu.memory_space<vmem>>) attributes {dimension_semantics = [#tpu.dimension_semantics<parallel>, #tpu.dimension_semantics<arbitrary>], iteration_bounds = array<i64: 1, 1>, scalar_prefetch = 0 : i64, scratch_operands = 0 : i64, tpu.core_type = #tpu.core_type<tc>, window_params = [{transform_indices = @transform_0, window_bounds = array<i64: 8, 256>}, {transform_indices = @transform_1, window_bounds = array<i64: 8, 256>}, {transform_indices = @transform_2, window_bounds = array<i64: 1, 8, 256>}, {transform_indices = @transform_3, window_bounds = array<i64: 1, 8, 256>}]} {
    %c0_i32 = arith.constant 0 : i32
    %0 = arith.cmpi eq, %arg1, %c0_i32 : i32
    %1 = arith.extui %0 : i1 to i32
    %c0_i32_0 = arith.constant 0 : i32
    %2 = arith.cmpi ne, %1, %c0_i32_0 : i32
    scf.if %2 {
      %cst_17 = arith.constant 0.000000e+00 : f32
      %20 = vector.broadcast %cst_17 : f32 to vector<1x8x256xf32>
      %c0_18 = arith.constant 0 : index
      %c0_19 = arith.constant 0 : index
      %c0_20 = arith.constant 0 : index
      %21 = vector.load %arg4[%c0_18, %c0_19, %c0_20] : memref<1x8x256xf32, #tpu.memory_space<vmem>>, vector<1x8x256xf32>
      tpu.vector_store %arg4[%c0_18, %c0_19, %c0_20], %20 {strides = array<i32>} : memref<1x8x256xf32, #tpu.memory_space<vmem>>, vector<1x8x256xf32>,
      %cst_21 = arith.constant 0.000000e+00 : f32
      %22 = vector.broadcast %cst_21 : f32 to vector<1x8x256xf32>
      %c0_22 = arith.constant 0 : index
      %c0_23 = arith.constant 0 : index
      %c0_24 = arith.constant 0 : index
      %23 = vector.load %arg5[%c0_22, %c0_23, %c0_24] : memref<1x8x256xf32, #tpu.memory_space<vmem>>, vector<1x8x256xf32>
      tpu.vector_store %arg5[%c0_22, %c0_23, %c0_24], %22 {strides = array<i32>} : memref<1x8x256xf32, #tpu.memory_space<vmem>>, vector<1x8x256xf32>,
    } else {
    }
    %c0 = arith.constant 0 : index
    %c0_1 = arith.constant 0 : index
    %3 = vector.load %arg2[%c0, %c0_1] : memref<8x256xf32, #tpu.memory_space<vmem>>, vector<8x256xf32>
    %c0_2 = arith.constant 0 : index
    %c0_3 = arith.constant 0 : index
    %4 = vector.load %arg3[%c0_2, %c0_3] : memref<8x256xf32, #tpu.memory_space<vmem>>, vector<8x256xf32>
    %5 = arith.subf %3, %4 : vector<8x256xf32>
    %6 = arith.mulf %5, %5 : vector<8x256xf32>
    %7 = arith.mulf %4, %4 : vector<8x256xf32>
    %c0_4 = arith.constant 0 : index
    %c0_5 = arith.constant 0 : index
    %c0_6 = arith.constant 0 : index
    %8 = vector.load %arg4[%c0_4, %c0_5, %c0_6] : memref<1x8x256xf32, #tpu.memory_space<vmem>>, vector<1x8x256xf32>
    %9 = vector.shape_cast %6 : vector<8x256xf32> to vector<1x8x256xf32>
    %cst = arith.constant dense<0.000000e+00> : vector<8x256xf32>
    %10 = vector.multi_reduction <add>, %9, %cst [0] : vector<1x8x256xf32> to vector<8x256xf32>
    %11 = vector.shape_cast %10 : vector<8x256xf32> to vector<1x8x256xf32>
    %12 = arith.addf %8, %11 : vector<1x8x256xf32>
    %c0_7 = arith.constant 0 : index
    %c0_8 = arith.constant 0 : index
    %c0_9 = arith.constant 0 : index
    %13 = vector.load %arg4[%c0_7, %c0_8, %c0_9] : memref<1x8x256xf32, #tpu.memory_space<vmem>>, vector<1x8x256xf32>
    tpu.vector_store %arg4[%c0_7, %c0_8, %c0_9], %12 {strides = array<i32>} : memref<1x8x256xf32, #tpu.memory_space<vmem>>, vector<1x8x256xf32>,
    %c0_10 = arith.constant 0 : index
    %c0_11 = arith.constant 0 : index
    %c0_12 = arith.constant 0 : index
    %14 = vector.load %arg5[%c0_10, %c0_11, %c0_12] : memref<1x8x256xf32, #tpu.memory_space<vmem>>, vector<1x8x256xf32>
    %15 = vector.shape_cast %7 : vector<8x256xf32> to vector<1x8x256xf32>
    %cst_13 = arith.constant dense<0.000000e+00> : vector<8x256xf32>
    %16 = vector.multi_reduction <add>, %15, %cst_13 [0] : vector<1x8x256xf32> to vector<8x256xf32>
    %17 = vector.shape_cast %16 : vector<8x256xf32> to vector<1x8x256xf32>
    %18 = arith.addf %14, %17 : vector<1x8x256xf32>
    %c0_14 = arith.constant 0 : index
    %c0_15 = arith.constant 0 : index
    %c0_16 = arith.constant 0 : index
    %19 = vector.load %arg5[%c0_14, %c0_15, %c0_16] : memref<1x8x256xf32, #tpu.memory_space<vmem>>, vector<1x8x256xf32>
    tpu.vector_store %arg5[%c0_14, %c0_15, %c0_16], %18 {strides = array<i32>} : memref<1x8x256xf32, #tpu.memory_space<vmem>>, vector<1x8x256xf32>,
    return
  }
  func.func @transform_0(%arg0: i32, %arg1: i32) -> (i32, i32) {
    %c1_i32 = arith.constant 1 : i32
    %0 = arith.muli %arg0, %c1_i32 : i32
    %1 = arith.addi %0, %arg1 : i32
    %c0_i32 = arith.constant 0 : i32
    %c0_i32_0 = arith.constant 0 : i32
    return %1, %c0_i32 : i32, i32
  }
  func.func @transform_1(%arg0: i32, %arg1: i32) -> (i32, i32) {
    %c1_i32 = arith.constant 1 : i32
    %0 = arith.muli %arg0, %c1_i32 : i32
    %1 = arith.addi %0, %arg1 : i32
    %c0_i32 = arith.constant 0 : i32
    %c0_i32_0 = arith.constant 0 : i32
    return %1, %c0_i32 : i32, i32
  }
  func.func @transform_2(%arg0: i32, %arg1: i32) -> (i32, i32, i32) {
    %c0_i32 = arith.constant 0 : i32
    %c0_i32_0 = arith.constant 0 : i32
    %c0_i32_1 = arith.constant 0 : i32
    return %arg0, %c0_i32, %c0_i32_0 : i32, i32, i32
  }
  func.func @transform_3(%arg0: i32, %arg1: i32) -> (i32, i32, i32) {
    %c0_i32 = arith.constant 0 : i32
    %c0_i32_0 = arith.constant 0 : i32
    %c0_i32_1 = arith.constant 0 : i32
    return %arg0, %c0_i32, %c0_i32_0 : i32, i32, i32
  }
}

</mosaic_0001>

<llo_original>
// kernel: tpu_custom_call.1
$region0: #{tpu_custom_call.1}
  #allocation0 [shape = 'u32[]', space=smem, size = 0x4, offset = 0x4, fixed_abs, tag = 'smem constant byte address 0x4 - core index']
  #allocation1 [shape = 'u32[72,128]{1,0:T(1,128)}', space=vmem, size = 0x9000, scoped, tag = 'internal scratch']
  %s0 = inlined_call_operand.hbm [shape: f32[8,256], index: 0, kind: input, shape index: {}]
  %s1 = inlined_call_operand.hbm [shape: f32[8,256], index: 1, kind: input, shape index: {}]
  %s2 = inlined_call_operand.hbm [shape: f32[1,8,256], index: 2, kind: output, shape index: {0}]
  %s3 = inlined_call_operand.hbm [shape: f32[1,8,256], index: 3, kind: output, shape index: {1}]
  %4 = xla_tuple %s2, %s3
  %s5 = sld [smem:[#allocation0]]
  $region38: #{tpu_custom_call.1} parent=0
    _
  %s7 = ssub.s32 1, %s5
  %s8 = scalar_select 0, %s7, %s5
  $region1: #{tpu_custom_call.1} parent=0
    #allocation2 [shape = 'u8[8192]{0}', space=vmem, size = 0x2000, scoped, tag = 'input window, operand 0, single buffered']
    #allocation3 [shape = 's32[1]{0}', space=sflag, size = 0x4, scoped, tag = 'scoped memory for tpu_custom_call.1']
    #allocation4 [shape = 's32[1]{0}', space=sflag, size = 0x4, scoped, tag = 'scoped memory for tpu_custom_call.1']
    #allocation5 [shape = 'u8[8192]{0}', space=vmem, size = 0x2000, scoped, tag = 'input window, operand 1, single buffered']
    #allocation6 [shape = 's32[1]{0}', space=sflag, size = 0x4, scoped, tag = 'scoped memory for tpu_custom_call.1']
    #allocation7 [shape = 'u8[8192]{0}', space=vmem, size = 0x2000, scoped, tag = 'output window, operand 0, single buffered']
    #allocation8 [shape = 'u8[8192]{0}', space=vmem, size = 0x2000, scoped, tag = 'output window, operand 1, single buffered']
    #allocation9 [shape = 's32[1]{0}', space=sflag, size = 0x4, scoped, tag = 'scoped memory for tpu_custom_call.1']
    %9 = vsyncpa [#allocation3], 0
    %10 = vsyncpa [#allocation6], 0
    %11 = vsyncpa [#allocation4], 0
    %12 = vsyncpa [#allocation9], 0
    // Predicated region
    $region2: #{tpu_custom_call.1} parent=1 // pred_check
      _
    $region3: #{tpu_custom_call.1} parent=1 // pred_check_branch
      %14 = sbr.rel (0) target = $region5
    $region4: #{tpu_custom_call.1} parent=1 // pred_region
      %s15 = sadd.s32 0, 0
      %17 = vsyncadd [#allocation3], 0
      %s18 = smul.addr %s15, 2
      %s19 = smul.addr %s18, 8
      %s20 = scalar_lea.hbm %s0, %s19
      %s22 = sshll.u32 %s20, 4
      %s23 = int_to_ptr.hbm [resolvable:$true] %s22
      %s24 = sshll.u32 [#allocation2], 4
      %s25 = int_to_ptr.vmem [resolvable:$true] %s24
      %27 = dma.hbm_to_vmem [thread:$0]  %s23, 256, %s25, [#allocation3]
    $region5: #{tpu_custom_call.1} parent=1 // pred_fallthru
      _
    // Predicated region
    $region6: #{tpu_custom_call.1} parent=1 // pred_check
      _
    $region7: #{tpu_custom_call.1} parent=1 // pred_check_branch
      %29 = sbr.rel (0) target = $region9
    $region8: #{tpu_custom_call.1} parent=1 // pred_region
      %s30 = sadd.s32 0, 0
      %32 = vsyncadd [#allocation6], 0
      %s33 = smul.addr %s30, 2
      %s34 = smul.addr %s33, 8
      %s35 = scalar_lea.hbm %s1, %s34
      %s37 = sshll.u32 %s35, 4
      %s38 = int_to_ptr.hbm [resolvable:$true] %s37
      %s39 = sshll.u32 [#allocation5], 4
      %s40 = int_to_ptr.vmem [resolvable:$true] %s39
      %42 = dma.hbm_to_vmem [thread:$0]  %s38, 256, %s40, [#allocation6]
    $region9: #{tpu_custom_call.1} parent=1 // pred_fallthru
      _
    // Predicated region
    $region10: #{tpu_custom_call.1} parent=1 // pred_check
      _
    $region11: #{tpu_custom_call.1} parent=1 // pred_check_branch
      %44 = sbr.rel (0) target = $region13
    $region12: #{tpu_custom_call.1} parent=1 // pred_region
      %46 = dma.done [#allocation3], 256
    $region13: #{tpu_custom_call.1} parent=1 // pred_fallthru
      _
    // Predicated region
    $region14: #{tpu_custom_call.1} parent=1 // pred_check
      _
    $region15: #{tpu_custom_call.1} parent=1 // pred_check_branch
      %48 = sbr.rel (0) target = $region17
    $region16: #{tpu_custom_call.1} parent=1 // pred_region
      %50 = dma.done [#allocation6], 256
    $region17: #{tpu_custom_call.1} parent=1 // pred_fallthru
      _
    %s51 = sadd.s32 0, 0
    %s52 = sadd.s32 0, 0
    %p53 = scmp.eq.s32.totalorder 0, 0
    // Predicated region
    $region18: #{tpu_custom_call.1} parent=1 // pred_check
      %p54 = pneg %p53
    $region19: #{tpu_custom_call.1} parent=1 // pred_check_branch
      %56 = sbr.rel (%p54) target = $region21
    $region20: #{tpu_custom_call.1} parent=1 // pred_region
      %57 = vst [vmem:[#allocation7] sm:$0xff] 0.0
      %58 = vst [vmem:[#allocation7 + $0x8] sm:$0xff] 0.0
      %59 = vst [vmem:[#allocation8] sm:$0xff] 0.0
      %60 = vst [vmem:[#allocation8 + $0x8] sm:$0xff] 0.0
    $region21: #{tpu_custom_call.1} parent=1 // pred_fallthru
      _
    %v61 = vld [vmem:[#allocation2] sm:$0xff]
    %v62 = vld [vmem:[#allocation2 + $0x8] sm:$0xff]
    %v63 = vld [vmem:[#allocation5] sm:$0xff]
    %v64 = vld [vmem:[#allocation5 + $0x8] sm:$0xff]
    %v65 = vsub.f32 %v61, %v63
    %v66 = vsub.f32 %v62, %v64
    %v67 = vmul.f32 %v65, %v65
    %v68 = vmul.f32 %v66, %v66
    %v69 = vmul.f32 %v63, %v63
    %v70 = vmul.f32 %v64, %v64
    %v71 = vld [vmem:[#allocation7] sm:$0xff]
    %v72 = vld [vmem:[#allocation7 + $0x8] sm:$0xff]
    %v73 = vadd.f32 %v67, 0.0
    %v74 = vadd.f32 %v68, 0.0
    %v75 = vadd.f32 %v71, %v73
    %v76 = vadd.f32 %v72, %v74
    %77 = vst [vmem:[#allocation7] sm:$0xff] %v75
    %78 = vst [vmem:[#allocation7 + $0x8] sm:$0xff] %v76
    %v79 = vld [vmem:[#allocation8] sm:$0xff]
    %v80 = vld [vmem:[#allocation8 + $0x8] sm:$0xff]
    %v81 = vadd.f32 %v69, 0.0
    %v82 = vadd.f32 %v70, 0.0
    %v83 = vadd.f32 %v79, %v81
    %v84 = vadd.f32 %v80, %v82
    %85 = vst [vmem:[#allocation8] sm:$0xff] %v83
    %86 = vst [vmem:[#allocation8 + $0x8] sm:$0xff] %v84
    // Predicated region
    $region22: #{tpu_custom_call.1} parent=1 // pred_check
      _
    $region23: #{tpu_custom_call.1} parent=1 // pred_check_branch
      %88 = sbr.rel (0) target = $region25
    $region24: #{tpu_custom_call.1} parent=1 // pred_region
      %90 = vsyncadd [#allocation4], 0
      %s92 = sshll.u32 [#allocation7], 4
      %s93 = int_to_ptr.vmem [resolvable:$true] %s92
      %s94 = sshll.u32 %s2, 4
      %s95 = int_to_ptr.hbm [resolvable:$true] %s94
      %97 = dma.vmem_to_hbm [thread:$0]  %s93, 256, %s95, [#allocation4]
    $region25: #{tpu_custom_call.1} parent=1 // pred_fallthru
      _
    // Predicated region
    $region26: #{tpu_custom_call.1} parent=1 // pred_check
      _
    $region27: #{tpu_custom_call.1} parent=1 // pred_check_branch
      %99 = sbr.rel (0) target = $region29
    $region28: #{tpu_custom_call.1} parent=1 // pred_region
      %101 = vsyncadd [#allocation9], 0
      %s103 = sshll.u32 [#allocation8], 4
      %s104 = int_to_ptr.vmem [resolvable:$true] %s103
      %s105 = sshll.u32 %s3, 4
      %s106 = int_to_ptr.hbm [resolvable:$true] %s105
      %108 = dma.vmem_to_hbm [thread:$0]  %s104, 256, %s106, [#allocation9]
    $region29: #{tpu_custom_call.1} parent=1 // pred_fallthru
      _
    // Predicated region
    $region30: #{tpu_custom_call.1} parent=1 // pred_check
      _
    $region31: #{tpu_custom_call.1} parent=1 // pred_check_branch
      %110 = sbr.rel (0) target = $region33
    $region32: #{tpu_custom_call.1} parent=1 // pred_region
      %112 = dma.done [#allocation4], 256
    $region33: #{tpu_custom_call.1} parent=1 // pred_fallthru
      _
    // Predicated region
    $region34: #{tpu_custom_call.1} parent=1 // pred_check
      _
    $region35: #{tpu_custom_call.1} parent=1 // pred_check_branch
      %114 = sbr.rel (0) target = $region37
    $region36: #{tpu_custom_call.1} parent=1 // pred_region
      %116 = dma.done [#allocation9], 256
    $region37: #{tpu_custom_call.1} parent=1 // pred_fallthru
      _
    %117 = vsyncpa [#allocation3], 1
    %118 = vsyncpa [#allocation6], 1
    %119 = vsyncpa [#allocation4], 1
    %120 = vsyncpa [#allocation9], 1

</llo_original>
